<compile_context>
chip_gen: v5e
topology: v5e:2x2
jax: 0.10.0
libtpu: 0.0.40
codegen_flags: <defaults>
</compile_context>

<pallas_src>
import functools
import math

import jax
import jax.numpy as jnp
from jax import lax
from jax.experimental import pallas as pl
from jax.experimental.pallas import tpu as pltpu


def _mhsa_kernel(x_ref, wqkv_ref, bqkv_ref, wo_ref, bo_ref, o_ref, *,
                 head_nums, head_dims, embed_dim):
    E = embed_dim
    x = x_ref[0]                                   # (S, E) bf16
    S = x.shape[0]

    # One fused MXU pass produces Q|K|V (1/sqrt(hd) already folded into the Q
    # columns on the host). bf16 in, f32 accumulation, f32 bias add.
    qkv = jnp.dot(x, wqkv_ref[...], preferred_element_type=jnp.float32)
    qkv = qkv + bqkv_ref[...]                      # (S, 3E) f32

    # Contract the last dim of both operands: q @ k^T without an XLU transpose.
    trans_b = (((1,), (1,)), ((), ()))

    acc = jnp.zeros((S, E), jnp.float32)
    for h in range(head_nums):                     # static unroll over heads
        lo = h * head_dims
        qh = qkv[:, lo:lo + head_dims].astype(jnp.bfloat16)                  # (S, hd)
        kh = qkv[:, E + lo:E + lo + head_dims].astype(jnp.bfloat16)          # (S, hd)
        vh = qkv[:, 2 * E + lo:2 * E + lo + head_dims].astype(jnp.bfloat16)  # (S, hd)

        scores = lax.dot_general(qh, kh, trans_b,
                                 preferred_element_type=jnp.float32)         # (S, S)
        scores = scores - jnp.max(scores, axis=-1, keepdims=True)
        p = jnp.exp(scores)
        p = p * pl.reciprocal(jnp.sum(p, axis=-1, keepdims=True), approx=True)
        # dropout(p) == identity in eval mode

        ctx = jnp.dot(p.astype(jnp.bfloat16), vh,
                      preferred_element_type=jnp.float32)                    # (S, hd)

        # Fold the head-concat into the output projection: accumulate per head
        # against the matching sublane slab of W_out (no lane concat/relayout).
        acc = acc + jnp.dot(ctx.astype(jnp.bfloat16),
                            wo_ref[lo:lo + head_dims, :],
                            preferred_element_type=jnp.float32)              # (S, E)

    o_ref[0] = (acc + bo_ref[...]).astype(o_ref.dtype)


def multi_head_self_attention(x, params, *, head_nums):
    B, S, E = x.shape
    head_dims = E // head_nums
    wq, bq, wk, bk, wv, bv, wo, bo = params

    # Host-side prep (outside the kernel):
    #   * fold 1/sqrt(head_dims) into the Q projection,
    #   * fuse Q|K|V weights/biases into single slabs,
    #   * cast matmul operands to bf16 (f32 accumulation inside the kernel).
    inv_sqrt_d = 1.0 / math.sqrt(head_dims)
    w_qkv = jnp.concatenate([wq * inv_sqrt_d, wk, wv], axis=1).astype(jnp.bfloat16)  # (E, 3E)
    b_qkv = jnp.concatenate([bq * inv_sqrt_d, bk, bv], axis=1)                       # (1, 3E) f32
    wo_bf = wo.astype(jnp.bfloat16)
    x_bf = x.astype(jnp.bfloat16)

    kernel = functools.partial(_mhsa_kernel, head_nums=head_nums,
                               head_dims=head_dims, embed_dim=E)

    return pl.pallas_call(
        kernel,
        out_shape=jax.ShapeDtypeStruct((B, S, E), x.dtype),
        grid_spec=pltpu.PrefetchScalarGridSpec(
            num_scalar_prefetch=0,
            grid=(B,),
            in_specs=[
                pl.BlockSpec((1, S, E), lambda b: (b, 0, 0)),   # x, one batch elem per step
                pl.BlockSpec((E, 3 * E), lambda b: (0, 0)),     # fused W_qkv (bf16)
                pl.BlockSpec((1, 3 * E), lambda b: (0, 0)),     # fused b_qkv (f32)
                pl.BlockSpec((E, E), lambda b: (0, 0)),         # W_out (bf16)
                pl.BlockSpec((1, E), lambda b: (0, 0)),         # b_out (f32)
            ],
            out_specs=pl.BlockSpec((1, S, E), lambda b: (b, 0, 0)),
        ),
        compiler_params=pltpu.CompilerParams(dimension_semantics=("parallel",)),
    )(x_bf, w_qkv, b_qkv, wo_bf, bo)


def _reference(x, params, head_nums):
    """Pure-JAX f32 reference mirroring the PyTorch forward (eval mode)."""
    B, S, E = x.shape
    hd = E // head_nums
    wq, bq, wk, bk, wv, bv, wo, bo = params
    q = x @ wq + bq
    k = x @ wk + bk
    v = x @ wv + bv

    def split(t):  # (B,S,E) -> (B,H,S,hd)
        return t.reshape(B, S, head_nums, hd).transpose(0, 2, 1, 3)

    qh, kh, vh = split(q), split(k), split(v)
    scores = jnp.einsum("bhqd,bhkd->bhqk", qh, kh) / math.sqrt(hd)
    attn = jax.nn.softmax(scores, axis=-1)
    out = jnp.einsum("bhqk,bhkd->bhqd", attn, vh)
    out = out.transpose(0, 2, 1, 3).reshape(B, S, E)
    return out @ wo + bo


if __name__ == "__main__":
    B, S, E, H = 2, 8, 32, 4  # batch, seq, embed_dim, head_nums

    key = jax.random.PRNGKey(0)
    keys = jax.random.split(key, 9)
    scale = 1.0 / math.sqrt(E)
    wq = jax.random.uniform(keys[0], (E, E), jnp.float32, -scale, scale)
    bq = jax.random.uniform(keys[1], (1, E), jnp.float32, -scale, scale)
    wk = jax.random.uniform(keys[2], (E, E), jnp.float32, -scale, scale)
    bk = jax.random.uniform(keys[3], (1, E), jnp.float32, -scale, scale)
    wv = jax.random.uniform(keys[4], (E, E), jnp.float32, -scale, scale)
    bv = jax.random.uniform(keys[5], (1, E), jnp.float32, -scale, scale)
    wo = jax.random.uniform(keys[6], (E, E), jnp.float32, -scale, scale)
    bo = jax.random.uniform(keys[7], (1, E), jnp.float32, -scale, scale)
    params = (wq, bq, wk, bk, wv, bv, wo, bo)

    x = jax.random.normal(keys[8], (B, S, E), jnp.float32)

    out = multi_head_self_attention(x, params, head_nums=H)
    out = jax.block_until_ready(out)

    ref = _reference(x, params, H)
    assert out.shape == (B, S, E)
    # bf16 MXU operands (f32 accumulation) vs. f32 reference -> loosened tolerance.
    assert jnp.allclose(out, ref, atol=3e-2, rtol=3e-2), "mismatch vs reference"

    print("KERNEL_OK")
</pallas_src>

<mosaic_0001>
module attributes {stable_mosaic.version = 11 : i64} {
  func.func @_mhsa_kernel(%arg0: i32, %arg1: memref<1x8x32xbf16, #tpu.memory_space<vmem>>, %arg2: memref<32x96xbf16, #tpu.memory_space<vmem>>, %arg3: memref<1x96xf32, #tpu.memory_space<vmem>>, %arg4: memref<32x32xbf16, #tpu.memory_space<vmem>>, %arg5: memref<1x32xf32, #tpu.memory_space<vmem>>, %arg6: memref<1x8x32xf32, #tpu.memory_space<vmem>>) attributes {dimension_semantics = [#tpu.dimension_semantics<parallel>], iteration_bounds = array<i64: 2>, scalar_prefetch = 0 : i64, scratch_operands = 0 : i64, tpu.core_type = #tpu.core_type<tc>, window_params = [{transform_indices = @transform_0, window_bounds = array<i64: 1, 8, 32>}, {pipeline_mode = #tpu.pipeline_mode<synchronous>, transform_indices = @transform_1, window_bounds = array<i64: 32, 96>}, {pipeline_mode = #tpu.pipeline_mode<synchronous>, transform_indices = @transform_2, window_bounds = array<i64: 1, 96>}, {pipeline_mode = #tpu.pipeline_mode<synchronous>, transform_indices = @transform_3, window_bounds = array<i64: 32, 32>}, {pipeline_mode = #tpu.pipeline_mode<synchronous>, transform_indices = @transform_4, window_bounds = array<i64: 1, 32>}, {transform_indices = @transform_5, window_bounds = array<i64: 1, 8, 32>}]} {
    %c0 = arith.constant 0 : index
    %c0_0 = arith.constant 0 : index
    %c0_1 = arith.constant 0 : index
    %0 = vector.load %arg1[%c0, %c0_0, %c0_1] : memref<1x8x32xbf16, #tpu.memory_space<vmem>>, vector<1x8x32xbf16>
    %1 = vector.shape_cast %0 : vector<1x8x32xbf16> to vector<8x32xbf16>
    %c0_2 = arith.constant 0 : index
    %c0_3 = arith.constant 0 : index
    %2 = vector.load %arg2[%c0_2, %c0_3] : memref<32x96xbf16, #tpu.memory_space<vmem>>, vector<32x96xbf16>
    %cst = arith.constant dense<0.000000e+00> : vector<8x96xf32>
    %3 = tpu.matmul %1, %2, %cst {dimension_numbers = #tpu.dot_dimension_numbers<[1], [0], [0], [1], [0, 0, 1, 1], [], []>} : vector<8x32xbf16>, vector<32x96xbf16>, vector<8x96xf32> -> vector<8x96xf32>
    %c0_4 = arith.constant 0 : index
    %c0_5 = arith.constant 0 : index
    %4 = vector.load %arg3[%c0_4, %c0_5] : memref<1x96xf32, #tpu.memory_space<vmem>>, vector<1x96xf32>
    %5 = vector.broadcast %4 : vector<1x96xf32> to vector<8x96xf32>
    %6 = arith.addf %3, %5 : vector<8x96xf32>
    %cst_6 = arith.constant 0.000000e+00 : f32
    %7 = vector.broadcast %cst_6 : f32 to vector<8x32xf32>
    %8 = vector.extract_strided_slice %6 {offsets = [0, 0], sizes = [8, 8], strides = [1, 1]} : vector<8x96xf32> to vector<8x8xf32>
    %9 = arith.truncf %8 : vector<8x8xf32> to vector<8x8xbf16>
    %10 = vector.extract_strided_slice %6 {offsets = [0, 32], sizes = [8, 8], strides = [1, 1]} : vector<8x96xf32> to vector<8x8xf32>
    %11 = arith.truncf %10 : vector<8x8xf32> to vector<8x8xbf16>
    %12 = vector.extract_strided_slice %6 {offsets = [0, 64], sizes = [8, 8], strides = [1, 1]} : vector<8x96xf32> to vector<8x8xf32>
    %13 = arith.truncf %12 : vector<8x8xf32> to vector<8x8xbf16>
    %cst_7 = arith.constant dense<0.000000e+00> : vector<8x8xf32>
    %14 = tpu.matmul %9, %11, %cst_7 {dimension_numbers = #tpu.dot_dimension_numbers<[1], [1], [0], [0], [0, 0, 1, 0], [], []>} : vector<8x8xbf16>, vector<8x8xbf16>, vector<8x8xf32> -> vector<8x8xf32>
    %cst_8 = arith.constant dense<0xFF800000> : vector<8xf32>
    %15 = vector.multi_reduction <maximumf>, %14, %cst_8 [1] : vector<8x8xf32> to vector<8xf32>
    %16 = vector.shape_cast %15 : vector<8xf32> to vector<8x1xf32>
    %17 = vector.broadcast %16 : vector<8x1xf32> to vector<8x8xf32>
    %18 = arith.subf %14, %17 : vector<8x8xf32>
    %19 = math.exp %18 : vector<8x8xf32>
    %cst_9 = arith.constant dense<0.000000e+00> : vector<8xf32>
    %20 = vector.multi_reduction <add>, %19, %cst_9 [1] : vector<8x8xf32> to vector<8xf32>
    %21 = vector.shape_cast %20 : vector<8xf32> to vector<8x1xf32>
    %22 = tpu.reciprocal %21 {approx = true} : vector<8x1xf32> -> vector<8x1xf32>
    %23 = vector.broadcast %22 : vector<8x1xf32> to vector<8x8xf32>
    %24 = arith.mulf %19, %23 : vector<8x8xf32>
    %25 = arith.truncf %24 : vector<8x8xf32> to vector<8x8xbf16>
    %cst_10 = arith.constant dense<0.000000e+00> : vector<8x8xf32>
    %26 = tpu.matmul %25, %13, %cst_10 {dimension_numbers = #tpu.dot_dimension_numbers<[1], [0], [0], [1], [0, 0, 1, 1], [], []>} : vector<8x8xbf16>, vector<8x8xbf16>, vector<8x8xf32> -> vector<8x8xf32>
    %27 = arith.truncf %26 : vector<8x8xf32> to vector<8x8xbf16>
    %c0_11 = arith.constant 0 : index
    %c0_12 = arith.constant 0 : index
    %28 = vector.load %arg4[%c0_11, %c0_12] : memref<32x32xbf16, #tpu.memory_space<vmem>>, vector<8x32xbf16>
    %cst_13 = arith.constant dense<0.000000e+00> : vector<8x32xf32>
    %29 = tpu.matmul %27, %28, %cst_13 {dimension_numbers = #tpu.dot_dimension_numbers<[1], [0], [0], [1], [0, 0, 1, 1], [], []>} : vector<8x8xbf16>, vector<8x32xbf16>, vector<8x32xf32> -> vector<8x32xf32>
    %30 = arith.addf %7, %29 : vector<8x32xf32>
    %31 = vector.extract_strided_slice %6 {offsets = [0, 8], sizes = [8, 8], strides = [1, 1]} : vector<8x96xf32> to vector<8x8xf32>
    %32 = arith.truncf %31 : vector<8x8xf32> to vector<8x8xbf16>
    %33 = vector.extract_strided_slice %6 {offsets = [0, 40], sizes = [8, 8], strides = [1, 1]} : vector<8x96xf32> to vector<8x8xf32>
    %34 = arith.truncf %33 : vector<8x8xf32> to vector<8x8xbf16>
    %35 = vector.extract_strided_slice %6 {offsets = [0, 72], sizes = [8, 8], strides = [1, 1]} : vector<8x96xf32> to vector<8x8xf32>
    %36 = arith.truncf %35 : vector<8x8xf32> to vector<8x8xbf16>
    %cst_14 = arith.constant dense<0.000000e+00> : vector<8x8xf32>
    %37 = tpu.matmul %32, %34, %cst_14 {dimension_numbers = #tpu.dot_dimension_numbers<[1], [1], [0], [0], [0, 0, 1, 0], [], []>} : vector<8x8xbf16>, vector<8x8xbf16>, vector<8x8xf32> -> vector<8x8xf32>
    %cst_15 = arith.constant dense<0xFF800000> : vector<8xf32>
    %38 = vector.multi_reduction <maximumf>, %37, %cst_15 [1] : vector<8x8xf32> to vector<8xf32>
    %39 = vector.shape_cast %38 : vector<8xf32> to vector<8x1xf32>
    %40 = vector.broadcast %39 : vector<8x1xf32> to vector<8x8xf32>
    %41 = arith.subf %37, %40 : vector<8x8xf32>
    %42 = math.exp %41 : vector<8x8xf32>
    %cst_16 = arith.constant dense<0.000000e+00> : vector<8xf32>
    %43 = vector.multi_reduction <add>, %42, %cst_16 [1] : vector<8x8xf32> to vector<8xf32>
    %44 = vector.shape_cast %43 : vector<8xf32> to vector<8x1xf32>
    %45 = tpu.reciprocal %44 {approx = true} : vector<8x1xf32> -> vector<8x1xf32>
    %46 = vector.broadcast %45 : vector<8x1xf32> to vector<8x8xf32>
    %47 = arith.mulf %42, %46 : vector<8x8xf32>
    %48 = arith.truncf %47 : vector<8x8xf32> to vector<8x8xbf16>
    %cst_17 = arith.constant dense<0.000000e+00> : vector<8x8xf32>
    %49 = tpu.matmul %48, %36, %cst_17 {dimension_numbers = #tpu.dot_dimension_numbers<[1], [0], [0], [1], [0, 0, 1, 1], [], []>} : vector<8x8xbf16>, vector<8x8xbf16>, vector<8x8xf32> -> vector<8x8xf32>
    %50 = arith.truncf %49 : vector<8x8xf32> to vector<8x8xbf16>
    %c8 = arith.constant 8 : index
    %c0_18 = arith.constant 0 : index
    %51 = vector.load %arg4[%c8, %c0_18] : memref<32x32xbf16, #tpu.memory_space<vmem>>, vector<8x32xbf16>
    %cst_19 = arith.constant dense<0.000000e+00> : vector<8x32xf32>
    %52 = tpu.matmul %50, %51, %cst_19 {dimension_numbers = #tpu.dot_dimension_numbers<[1], [0], [0], [1], [0, 0, 1, 1], [], []>} : vector<8x8xbf16>, vector<8x32xbf16>, vector<8x32xf32> -> vector<8x32xf32>
    %53 = arith.addf %30, %52 : vector<8x32xf32>
    %54 = vector.extract_strided_slice %6 {offsets = [0, 16], sizes = [8, 8], strides = [1, 1]} : vector<8x96xf32> to vector<8x8xf32>
    %55 = arith.truncf %54 : vector<8x8xf32> to vector<8x8xbf16>
    %56 = vector.extract_strided_slice %6 {offsets = [0, 48], sizes = [8, 8], strides = [1, 1]} : vector<8x96xf32> to vector<8x8xf32>
    %57 = arith.truncf %56 : vector<8x8xf32> to vector<8x8xbf16>
    %58 = vector.extract_strided_slice %6 {offsets = [0, 80], sizes = [8, 8], strides = [1, 1]} : vector<8x96xf32> to vector<8x8xf32>
    %59 = arith.truncf %58 : vector<8x8xf32> to vector<8x8xbf16>
    %cst_20 = arith.constant dense<0.000000e+00> : vector<8x8xf32>
    %60 = tpu.matmul %55, %57, %cst_20 {dimension_numbers = #tpu.dot_dimension_numbers<[1], [1], [0], [0], [0, 0, 1, 0], [], []>} : vector<8x8xbf16>, vector<8x8xbf16>, vector<8x8xf32> -> vector<8x8xf32>
    %cst_21 = arith.constant dense<0xFF800000> : vector<8xf32>
    %61 = vector.multi_reduction <maximumf>, %60, %cst_21 [1] : vector<8x8xf32> to vector<8xf32>
    %62 = vector.shape_cast %61 : vector<8xf32> to vector<8x1xf32>
    %63 = vector.broadcast %62 : vector<8x1xf32> to vector<8x8xf32>
    %64 = arith.subf %60, %63 : vector<8x8xf32>
    %65 = math.exp %64 : vector<8x8xf32>
    %cst_22 = arith.constant dense<0.000000e+00> : vector<8xf32>
    %66 = vector.multi_reduction <add>, %65, %cst_22 [1] : vector<8x8xf32> to vector<8xf32>
    %67 = vector.shape_cast %66 : vector<8xf32> to vector<8x1xf32>
    %68 = tpu.reciprocal %67 {approx = true} : vector<8x1xf32> -> vector<8x1xf32>
    %69 = vector.broadcast %68 : vector<8x1xf32> to vector<8x8xf32>
    %70 = arith.mulf %65, %69 : vector<8x8xf32>
    %71 = arith.truncf %70 : vector<8x8xf32> to vector<8x8xbf16>
    %cst_23 = arith.constant dense<0.000000e+00> : vector<8x8xf32>
    %72 = tpu.matmul %71, %59, %cst_23 {dimension_numbers = #tpu.dot_dimension_numbers<[1], [0], [0], [1], [0, 0, 1, 1], [], []>} : vector<8x8xbf16>, vector<8x8xbf16>, vector<8x8xf32> -> vector<8x8xf32>
    %73 = arith.truncf %72 : vector<8x8xf32> to vector<8x8xbf16>
    %c16 = arith.constant 16 : index
    %c0_24 = arith.constant 0 : index
    %74 = vector.load %arg4[%c16, %c0_24] : memref<32x32xbf16, #tpu.memory_space<vmem>>, vector<8x32xbf16>
    %cst_25 = arith.constant dense<0.000000e+00> : vector<8x32xf32>
    %75 = tpu.matmul %73, %74, %cst_25 {dimension_numbers = #tpu.dot_dimension_numbers<[1], [0], [0], [1], [0, 0, 1, 1], [], []>} : vector<8x8xbf16>, vector<8x32xbf16>, vector<8x32xf32> -> vector<8x32xf32>
    %76 = arith.addf %53, %75 : vector<8x32xf32>
    %77 = vector.extract_strided_slice %6 {offsets = [0, 24], sizes = [8, 8], strides = [1, 1]} : vector<8x96xf32> to vector<8x8xf32>
    %78 = arith.truncf %77 : vector<8x8xf32> to vector<8x8xbf16>
    %79 = vector.extract_strided_slice %6 {offsets = [0, 56], sizes = [8, 8], strides = [1, 1]} : vector<8x96xf32> to vector<8x8xf32>
    %80 = arith.truncf %79 : vector<8x8xf32> to vector<8x8xbf16>
    %81 = vector.extract_strided_slice %6 {offsets = [0, 88], sizes = [8, 8], strides = [1, 1]} : vector<8x96xf32> to vector<8x8xf32>
    %82 = arith.truncf %81 : vector<8x8xf32> to vector<8x8xbf16>
    %cst_26 = arith.constant dense<0.000000e+00> : vector<8x8xf32>
    %83 = tpu.matmul %78, %80, %cst_26 {dimension_numbers = #tpu.dot_dimension_numbers<[1], [1], [0], [0], [0, 0, 1, 0], [], []>} : vector<8x8xbf16>, vector<8x8xbf16>, vector<8x8xf32> -> vector<8x8xf32>
    %cst_27 = arith.constant dense<0xFF800000> : vector<8xf32>
    %84 = vector.multi_reduction <maximumf>, %83, %cst_27 [1] : vector<8x8xf32> to vector<8xf32>
    %85 = vector.shape_cast %84 : vector<8xf32> to vector<8x1xf32>
    %86 = vector.broadcast %85 : vector<8x1xf32> to vector<8x8xf32>
    %87 = arith.subf %83, %86 : vector<8x8xf32>
    %88 = math.exp %87 : vector<8x8xf32>
    %cst_28 = arith.constant dense<0.000000e+00> : vector<8xf32>
    %89 = vector.multi_reduction <add>, %88, %cst_28 [1] : vector<8x8xf32> to vector<8xf32>
    %90 = vector.shape_cast %89 : vector<8xf32> to vector<8x1xf32>
    %91 = tpu.reciprocal %90 {approx = true} : vector<8x1xf32> -> vector<8x1xf32>
    %92 = vector.broadcast %91 : vector<8x1xf32> to vector<8x8xf32>
    %93 = arith.mulf %88, %92 : vector<8x8xf32>
    %94 = arith.truncf %93 : vector<8x8xf32> to vector<8x8xbf16>
    %cst_29 = arith.constant dense<0.000000e+00> : vector<8x8xf32>
    %95 = tpu.matmul %94, %82, %cst_29 {dimension_numbers = #tpu.dot_dimension_numbers<[1], [0], [0], [1], [0, 0, 1, 1], [], []>} : vector<8x8xbf16>, vector<8x8xbf16>, vector<8x8xf32> -> vector<8x8xf32>
    %96 = arith.truncf %95 : vector<8x8xf32> to vector<8x8xbf16>
    %c24 = arith.constant 24 : index
    %c0_30 = arith.constant 0 : index
    %97 = vector.load %arg4[%c24, %c0_30] : memref<32x32xbf16, #tpu.memory_space<vmem>>, vector<8x32xbf16>
    %cst_31 = arith.constant dense<0.000000e+00> : vector<8x32xf32>
    %98 = tpu.matmul %96, %97, %cst_31 {dimension_numbers = #tpu.dot_dimension_numbers<[1], [0], [0], [1], [0, 0, 1, 1], [], []>} : vector<8x8xbf16>, vector<8x32xbf16>, vector<8x32xf32> -> vector<8x32xf32>
    %99 = arith.addf %76, %98 : vector<8x32xf32>
    %c0_32 = arith.constant 0 : index
    %c0_33 = arith.constant 0 : index
    %100 = vector.load %arg5[%c0_32, %c0_33] : memref<1x32xf32, #tpu.memory_space<vmem>>, vector<1x32xf32>
    %101 = vector.broadcast %100 : vector<1x32xf32> to vector<8x32xf32>
    %102 = arith.addf %99, %101 : vector<8x32xf32>
    %c0_34 = arith.constant 0 : index
    %c0_35 = arith.constant 0 : index
    %c0_36 = arith.constant 0 : index
    %103 = vector.load %arg6[%c0_34, %c0_35, %c0_36] : memref<1x8x32xf32, #tpu.memory_space<vmem>>, vector<1x8x32xf32>
    %104 = vector.shape_cast %103 : vector<1x8x32xf32> to vector<8x32xf32>
    %105 = vector.shape_cast %102 : vector<8x32xf32> to vector<1x8x32xf32>
    tpu.vector_store %arg6[%c0_34, %c0_35, %c0_36], %105 {strides = array<i32>} : memref<1x8x32xf32, #tpu.memory_space<vmem>>, vector<1x8x32xf32>,
    return
  }
  func.func @transform_0(%arg0: i32) -> (i32, i32, i32) {
    %c0_i32 = arith.constant 0 : i32
    %c0_i32_0 = arith.constant 0 : i32
    %c0_i32_1 = arith.constant 0 : i32
    return %arg0, %c0_i32, %c0_i32_0 : i32, i32, i32
  }
  func.func @transform_1(%arg0: i32) -> (i32, i32) {
    %c0_i32 = arith.constant 0 : i32
    %c0_i32_0 = arith.constant 0 : i32
    %c0_i32_1 = arith.constant 0 : i32
    return %c0_i32, %c0_i32_0 : i32, i32
  }
  func.func @transform_2(%arg0: i32) -> (i32, i32) {
    %c0_i32 = arith.constant 0 : i32
    %c0_i32_0 = arith.constant 0 : i32
    %c0_i32_1 = arith.constant 0 : i32
    return %c0_i32, %c0_i32_0 : i32, i32
  }
  func.func @transform_3(%arg0: i32) -> (i32, i32) {
    %c0_i32 = arith.constant 0 : i32
    %c0_i32_0 = arith.constant 0 : i32
    %c0_i32_1 = arith.constant 0 : i32
    return %c0_i32, %c0_i32_0 : i32, i32
  }
  func.func @transform_4(%arg0: i32) -> (i32, i32) {
    %c0_i32 = arith.constant 0 : i32
    %c0_i32_0 = arith.constant 0 : i32
    %c0_i32_1 = arith.constant 0 : i32
    return %c0_i32, %c0_i32_0 : i32, i32
  }
  func.func @transform_5(%arg0: i32) -> (i32, i32, i32) {
    %c0_i32 = arith.constant 0 : i32
    %c0_i32_0 = arith.constant 0 : i32
    %c0_i32_1 = arith.constant 0 : i32
    return %arg0, %c0_i32, %c0_i32_0 : i32, i32, i32
  }
}

</mosaic_0001>

<llo_original>
// kernel: tpu_custom_call.1
$region0: #{tpu_custom_call.1}
  #allocation0 [shape = 'u32[]', space=smem, size = 0x4, offset = 0x4, fixed_abs, tag = 'smem constant byte address 0x4 - core index']
  #allocation1 [shape = 'u32[72,128]{1,0:T(1,128)}', space=vmem, size = 0x9000, scoped, tag = 'internal scratch']
  %s0 = inlined_call_operand.hbm [shape: bf16[2,8,32], index: 0, kind: input, shape index: {}]
  %s1 = inlined_call_operand.hbm [shape: bf16[32,96], index: 1, kind: input, shape index: {}]
  %s2 = inlined_call_operand.vmem [shape: f32[1,96], index: 2, kind: input, shape index: {}]
  %s3 = inlined_call_operand.hbm [shape: bf16[32,32], index: 3, kind: input, shape index: {}]
  %s4 = inlined_call_operand.vmem [shape: f32[1,32], index: 4, kind: input, shape index: {}]
  %s5 = inlined_call_operand.hbm [shape: f32[2,8,32], index: 5, kind: output, shape index: {}]
  %s6 = sld [smem:[#allocation0]]
  $region65: #{tpu_custom_call.1} parent=0
    _
  %s8 = ssub.s32 1, %s6
  %s9 = scalar_select 0, %s8, %s6
  $region1: #{tpu_custom_call.1} parent=0
    #allocation2 [shape = 'u8[4096]{0}', space=vmem, size = 0x1000, scoped, tag = 'input window, operand 0']
    #allocation3 [shape = 's32[2]{0}', space=sflag, size = 0x8, scoped, tag = 'scoped memory for tpu_custom_call.1']
    #allocation4 [shape = 's32[2]{0}', space=sflag, size = 0x8, scoped, tag = 'scoped memory for tpu_custom_call.1']
    #allocation5 [shape = 'u8[8192]{0}', space=vmem, size = 0x2000, scoped, tag = 'input window, operand 1, single buffered']
    #allocation6 [shape = 's32[1]{0}', space=sflag, size = 0x4, scoped, tag = 'scoped memory for tpu_custom_call.1']
    #allocation7 [shape = 'u8[8192]{0}', space=vmem, size = 0x2000, scoped, tag = 'input window, operand 3, single buffered']
    #allocation8 [shape = 'u8[8192]{0}', space=vmem, size = 0x2000, scoped, tag = 'output window, operand 0']
    %10 = vsyncpa [#allocation3], 0
    %s11 = scalar_lea.sflag [#allocation3], 1
    %12 = vsyncpa %s11, 0
    %13 = vsyncpa [#allocation6], 0
    %14 = vsyncpa [#allocation4], 0
    %s15 = scalar_lea.sflag [#allocation4], 1
    %16 = vsyncpa %s15, 0
    loop: start=0, step=1, limit=4
    $region2: #{tpu_custom_call.1} parent=1 // loop_pre_header
      _
    $region3: #{tpu_custom_call.1} parent=1 // loop_header
      %s18 = sphi 0, %s22
      %p19 = scmp.ge.s32.totalorder %s18, 4
      %s28 = sphi 0, %s30
      %s31 = sphi 0, %s28
      %s32 = sphi 0, %s31
      %s48 = sphi 0, %s32
      %s52 = sphi 0, %s52
      %s54 = sphi 0, %s52
      %s55 = sphi 0, %s54
      %s69 = sphi 0, %s55
      %s73 = sphi 0, %s73
      %s75 = sphi 0, %s73
      %s76 = sphi 0, %s75
      %s90 = sphi 0, %s76
      %s94 = sphi 0, %s94
      %s96 = sphi 0, %s94
      %s97 = sphi 0, %s96
      %s111 = sphi 0, %s97
      %s115 = sphi 0, %s115
      %s117 = sphi 0, %s115
      %s118 = sphi 0, %s117
      %s132 = sphi 0, %s118
      %s138 = sphi 0, %s140
      %s141 = sphi 0, %s138
      %s142 = sphi 0, %s141
      %s158 = sphi 0, %s142
    $region4: #{tpu_custom_call.1} parent=1 // loop_header_branch
      %21 = sbr.rel (%p19) target = $region8
    $region5: #{tpu_custom_call.1} parent=1 // loop_body
      %s23 = ssub.s32 %s18, 1
      %s24 = ssub.s32 %s18, 2
      %s25 = sadd.s32 %s18, 1
      %s26 = ssub.s32 %s18, %s25
      %p27 = scmp.eq.s32.totalorder %s26, 0
      %s29 = sadd.s32 %s28, 1
      %s30 = scalar_select %p27, %s28, %s29
      %p33 = pneg %p27
      %p34 = scmp.eq.s32.totalorder %s18, 1
      %p35 = por %p33, %p34
      %p36 = scmp.ne.s32.totalorder %s28, %s31
      %p37 = scmp.eq.s32.totalorder %s18, 0
      %p38 = por %p36, %p37
      %p39 = scmp.ne.s32.totalorder %s28, %s31
      %p40 = scmp.eq.s32.totalorder %s23, 1
      %p41 = por %p39, %p40
      %p42 = scmp.ne.s32.totalorder %s31, %s32
      %p43 = scmp.eq.s32.totalorder %s23, 0
      %p44 = por %p42, %p43
      %p45 = scmp.ne.s32.totalorder %s31, %s32
      %p46 = scmp.eq.s32.totalorder %s24, 1
      %p47 = por %p45, %p46
      %p49 = scmp.ne.s32.totalorder %s32, %s48
      %p50 = scmp.eq.s32.totalorder %s24, 0
      %p51 = por %p49, %p50
      %s53 = sadd.s32 %s52, 1
      %p56 = scmp.eq.s32.totalorder %s18, 1
      %p57 = scmp.ne.s32.totalorder %s52, %s54
      %p58 = scmp.eq.s32.totalorder %s18, 0
      %p59 = por %p57, %p58
      %p60 = scmp.ne.s32.totalorder %s52, %s54
      %p61 = scmp.eq.s32.totalorder %s23, 1
      %p62 = por %p60, %p61
      %p63 = scmp.ne.s32.totalorder %s54, %s55
      %p64 = scmp.eq.s32.totalorder %s23, 0
      %p65 = por %p63, %p64
      %p66 = scmp.ne.s32.totalorder %s54, %s55
      %p67 = scmp.eq.s32.totalorder %s24, 1
      %p68 = por %p66, %p67
      %p70 = scmp.ne.s32.totalorder %s55, %s69
      %p71 = scmp.eq.s32.totalorder %s24, 0
      %p72 = por %p70, %p71
      %s74 = sadd.s32 %s73, 1
      %p77 = scmp.eq.s32.totalorder %s18, 1
      %p78 = scmp.ne.s32.totalorder %s73, %s75
      %p79 = scmp.eq.s32.totalorder %s18, 0
      %p80 = por %p78, %p79
      %p81 = scmp.ne.s32.totalorder %s73, %s75
      %p82 = scmp.eq.s32.totalorder %s23, 1
      %p83 = por %p81, %p82
      %p84 = scmp.ne.s32.totalorder %s75, %s76
      %p85 = scmp.eq.s32.totalorder %s23, 0
      %p86 = por %p84, %p85
      %p87 = scmp.ne.s32.totalorder %s75, %s76
      %p88 = scmp.eq.s32.totalorder %s24, 1
      %p89 = por %p87, %p88
      %p91 = scmp.ne.s32.totalorder %s76, %s90
      %p92 = scmp.eq.s32.totalorder %s24, 0
      %p93 = por %p91, %p92
      %s95 = sadd.s32 %s94, 1
      %p98 = scmp.eq.s32.totalorder %s18, 1
      %p99 = scmp.ne.s32.totalorder %s94, %s96
      %p100 = scmp.eq.s32.totalorder %s18, 0
      %p101 = por %p99, %p100
      %p102 = scmp.ne.s32.totalorder %s94, %s96
      %p103 = scmp.eq.s32.totalorder %s23, 1
      %p104 = por %p102, %p103
      %p105 = scmp.ne.s32.totalorder %s96, %s97
      %p106 = scmp.eq.s32.totalorder %s23, 0
      %p107 = por %p105, %p106
      %p108 = scmp.ne.s32.totalorder %s96, %s97
      %p109 = scmp.eq.s32.totalorder %s24, 1
      %p110 = por %p108, %p109
      %p112 = scmp.ne.s32.totalorder %s97, %s111
      %p113 = scmp.eq.s32.totalorder %s24, 0
      %p114 = por %p112, %p113
      %s116 = sadd.s32 %s115, 1
      %p119 = scmp.eq.s32.totalorder %s18, 1
      %p120 = scmp.ne.s32.totalorder %s115, %s117
      %p121 = scmp.eq.s32.totalorder %s18, 0
      %p122 = por %p120, %p121
      %p123 = scmp.ne.s32.totalorder %s115, %s117
      %p124 = scmp.eq.s32.totalorder %s23, 1
      %p125 = por %p123, %p124
      %p126 = scmp.ne.s32.totalorder %s117, %s118
      %p127 = scmp.eq.s32.totalorder %s23, 0
      %p128 = por %p126, %p127
      %p129 = scmp.ne.s32.totalorder %s117, %s118
      %p130 = scmp.eq.s32.totalorder %s24, 1
      %p131 = por %p129, %p130
      %p133 = scmp.ne.s32.totalorder %s118, %s132
      %p134 = scmp.eq.s32.totalorder %s24, 0
      %p135 = por %p133, %p134
      %s136 = ssub.s32 %s18, %s25
      %p137 = scmp.eq.s32.totalorder %s136, 0
      %s139 = sadd.s32 %s138, 1
      %s140 = scalar_select %p137, %s138, %s139
      %p143 = pneg %p137
      %p144 = scmp.eq.s32.totalorder %s18, 1
      %p145 = por %p143, %p144
      %p146 = scmp.ne.s32.totalorder %s138, %s141
      %p147 = scmp.eq.s32.totalorder %s18, 0
      %p148 = por %p146, %p147
      %p149 = scmp.ne.s32.totalorder %s138, %s141
      %p150 = scmp.eq.s32.totalorder %s23, 1
      %p151 = por %p149, %p150
      %p152 = scmp.ne.s32.totalorder %s141, %s142
      %p153 = scmp.eq.s32.totalorder %s23, 0
      %p154 = por %p152, %p153
      %p155 = scmp.ne.s32.totalorder %s141, %s142
      %p156 = scmp.eq.s32.totalorder %s24, 1
      %p157 = por %p155, %p156
      %p159 = scmp.ne.s32.totalorder %s142, %s158
      %p160 = scmp.eq.s32.totalorder %s24, 0
      %p161 = por %p159, %p160
      %p162 = scmp.le.s32.totalorder 1, %s18
      %p163 = scmp.lt.s32.totalorder %s18, 3
      %p164 = pnand %p162, %p163
      %p165 = pneg %p164
      // Predicated region
      $region9: #{tpu_custom_call.1} parent=5 // pred_check
        _
      $region10: #{tpu_custom_call.1} parent=5 // pred_check_branch
        %167 = sbr.rel (%p164) target = $region12
      $region11: #{tpu_custom_call.1} parent=5 // pred_region
        %s168 = ssub.s32 %s18, 1
        // Predicated region
        $region13: #{tpu_custom_call.1} parent=11 // pred_check
          %p169 = pneg %p65
        $region14: #{tpu_custom_call.1} parent=11 // pred_check_branch
          %171 = sbr.rel (%p169) target = $region16
        $region15: #{tpu_custom_call.1} parent=11 // pred_region
          %173 = vsyncadd [#allocation6], 0
          %s174 = sshll.u32 %s1, 4
          %s175 = int_to_ptr.hbm [resolvable:$true] %s174
          %s176 = sshll.u32 [#allocation5], 4
          %s177 = int_to_ptr.vmem [resolvable:$true] %s176
          %182 = dma.hbm_to_vmem [thread:$0]  %s175, 256, %s177, [#allocation6], 64, 64, 4
        $region16: #{tpu_custom_call.1} parent=11 // pred_fallthru
          _
        // Predicated region
        $region17: #{tpu_custom_call.1} parent=11 // pred_check
          %p183 = pneg %p86
        $region18: #{tpu_custom_call.1} parent=11 // pred_check_branch
          %185 = sbr.rel (%p183) target = $region20
        $region19: #{tpu_custom_call.1} parent=11 // pred_region
          _
        $region20: #{tpu_custom_call.1} parent=11 // pred_fallthru
          _
        // Predicated region
        $region21: #{tpu_custom_call.1} parent=11 // pred_check
          %p186 = pneg %p107
        $region22: #{tpu_custom_call.1} parent=11 // pred_check_branch
          %188 = sbr.rel (%p186) target = $region24
        $region23: #{tpu_custom_call.1} parent=11 // pred_region
          %190 = vsyncadd [#allocation6], 0
          %s191 = sshll.u32 %s3, 4
          %s192 = int_to_ptr.hbm [resolvable:$true] %s191
          %s193 = sshll.u32 [#allocation7], 4
          %s194 = int_to_ptr.vmem [resolvable:$true] %s193
          %199 = dma.hbm_to_vmem [thread:$0]  %s192, 256, %s194, [#allocation6], 64, 64, 4
        $region24: #{tpu_custom_call.1} parent=11 // pred_fallthru
          _
        // Predicated region
        $region25: #{tpu_custom_call.1} parent=11 // pred_check
          %p200 = pneg %p128
        $region26: #{tpu_custom_call.1} parent=11 // pred_check_branch
          %202 = sbr.rel (%p200) target = $region28
        $region27: #{tpu_custom_call.1} parent=11 // pred_region
          _
        $region28: #{tpu_custom_call.1} parent=11 // pred_fallthru
          _
      $region12: #{tpu_custom_call.1} parent=5 // pred_fallthru
        _
      %p203 = scmp.lt.s32.totalorder %s18, 2
      // Predicated region
      $region29: #{tpu_custom_call.1} parent=5 // pred_check
        %p204 = pneg %p203
      $region30: #{tpu_custom_call.1} parent=5 // pred_check_branch
        %206 = sbr.rel (%p204) target = $region32
      $region31: #{tpu_custom_call.1} parent=5 // pred_region
        // Predicated region
        $region33: #{tpu_custom_call.1} parent=31 // pred_check
          %p207 = pneg %p38
        $region34: #{tpu_custom_call.1} parent=31 // pred_check_branch
          %209 = sbr.rel (%p207) target = $region36
        $region35: #{tpu_custom_call.1} parent=31 // pred_region
          %s210 = sand.u32 %s28, 1
          %s211 = scalar_lea.sflag [#allocation3], %s210
          %s212 = sand.u32 %s28, 1
          %s213 = smul.addr %s212, 4
          %s214 = scalar_lea.vmem [#allocation2], %s213
          %216 = vsyncadd %s211, 0
          %s217 = smul.addr %s18, 4
          %s218 = scalar_lea.hbm %s0, %s217
          %s220 = sshll.u32 %s218, 4
          %s221 = int_to_ptr.hbm [resolvable:$true] %s220
          %s222 = sshll.u32 %s214, 4
          %s223 = int_to_ptr.vmem [resolvable:$true] %s222
          %225 = dma.hbm_to_vmem [thread:$0]  %s221, 64, %s223, %s211
        $region36: #{tpu_custom_call.1} parent=31 // pred_fallthru
          _
      $region32: #{tpu_custom_call.1} parent=5 // pred_fallthru
        _
      %p226 = scmp.le.s32.totalorder 1, %s18
      %p227 = scmp.lt.s32.totalorder %s18, 3
      %p228 = pnand %p226, %p227
      %p229 = pneg %p228
      // Predicated region
      $region37: #{tpu_custom_call.1} parent=5 // pred_check
        _
      $region38: #{tpu_custom_call.1} parent=5 // pred_check_branch
        %231 = sbr.rel (%p228) target = $region40
      $region39: #{tpu_custom_call.1} parent=5 // pred_region
        %s232 = ssub.s32 %s18, 1
        %s233 = sand.u32 %s31, 1
        %s234 = scalar_lea.sflag [#allocation3], %s233
        %s235 = sand.u32 %s31, 1
        %s236 = smul.addr %s235, 4
        %s237 = scalar_lea.vmem [#allocation2], %s236
        // Predicated region
        $region41: #{tpu_custom_call.1} parent=39 // pred_check
          %p238 = pneg %p44
        $region42: #{tpu_custom_call.1} parent=39 // pred_check_branch
          %240 = sbr.rel (%p238) target = $region44
        $region43: #{tpu_custom_call.1} parent=39 // pred_region
          %242 = dma.done %s234, 64
        $region44: #{tpu_custom_call.1} parent=39 // pred_fallthru
          _
        // Predicated region
        $region45: #{tpu_custom_call.1} parent=39 // pred_check
          %p243 = pneg %p65
        $region46: #{tpu_custom_call.1} parent=39 // pred_check_branch
          %245 = sbr.rel (%p243) target = $region48
        $region47: #{tpu_custom_call.1} parent=39 // pred_region
          %247 = dma.done [#allocation6], 256
        $region48: #{tpu_custom_call.1} parent=39 // pred_fallthru
          _
        // Predicated region
        $region49: #{tpu_custom_call.1} parent=39 // pred_check
          %p248 = pneg %p107
        $region50: #{tpu_custom_call.1} parent=39 // pred_check_branch
          %250 = sbr.rel (%p248) target = $region52
        $region51: #{tpu_custom_call.1} parent=39 // pred_region
          %252 = dma.done [#allocation6], 256
        $region52: #{tpu_custom_call.1} parent=39 // pred_fallthru
          _
        %s253 = sand.u32 %s31, 1
        %s254 = scalar_lea.sflag [#allocation3], %s253
        %s255 = sand.u32 %s31, 1
        %s256 = smul.addr %s255, 4
        %s257 = scalar_lea.vmem [#allocation2], %s256
        %p258 = pneg %p44
        %p259 = pneg %p41
        %p260 = pneg %p65
        %p261 = pneg %p62
        %p262 = pneg %p86
        %p263 = pneg %p83
        %p264 = pneg %p107
        %p265 = pneg %p104
        %p266 = pneg %p128
        %p267 = pneg %p125
        %p268 = pneg %p154
        %p269 = pneg %p151
        %s270 = sand.u32 %s141, 1
        %s271 = scalar_lea.sflag [#allocation4], %s270
        %s272 = sand.u32 %s141, 1
        %s273 = smul.addr %s272, 8
        %s274 = scalar_lea.vmem [#allocation8], %s273
        %v276 = vld [vmem:[%s237] sm:$0xf]
        %v277 = vld [vmem:[#allocation5] sm:$0xf]
        %v278 = vld [vmem:[#allocation5 + $0x4] sm:$0xf]
        %v279 = vld [vmem:[#allocation5 + $0x8] sm:$0xf]
        %v280 = vld [vmem:[#allocation5 + $0xc] sm:$0xf]
        %v281 = vld [vmem:[%s2] sm:$0x1]
        %v283 = vperm.slane %v281, 0
        %v289 = vunpack.c.l.b16 %v277
        %v290 = vunpack.c.l.b16 %v278
        %v291 = vunpack.c.l.b16 %v279
        %v292 = vunpack.c.l.b16 %v280
        %v293 = vpack.c.b16 %v290, %v289
        %v294 = vpack.c.b16 %v292, %v291
        %vm297 = vcmask 261120
        %v299 = vsel %vm297, %v276, 0
        %301 = vmatpush.bf16.msra.mxu0 0
        %302 = vmatpush.bf16.msra.mxu0 0
        %303 = vmatpush.bf16.msra.mxu0 0
        %304 = vmatpush.bf16.msra.mxu0 0
        %305 = vmatpush.bf16.msra.mxu0 0
        %306 = vmatpush.bf16.msra.mxu0 0
        %307 = vmatpush.bf16.msra.mxu0 %v294
        %308 = vmatpush.bf16.msra.mxu0 %v293
        %309 = vmatmul.bf16.gmra.mxu0 %v299
        %v310 = vpop.f32.mrf.mxu0
        %v311 = vadd.f32 %v283, %v310
        %v312 = vpop.f32.mrf.mxu0
        %313 = vdwg.mxu0
        %v314 = vpack.c.bf16 %v311, %v311
        %316 = vrot.lane.b32.xlu0 %v314, 96
        %v317 = vpop.permute.xlu0 %316
        %vm318 = vcmask 64512
        %v320 = vsel %vm318, %v314, 0
        %v323 = vsel %vm318, %v317, 0
        %325 = vmatpush.bf16.xpose.msra.mxu0 0
        %326 = vmatpush.bf16.xpose.msra.mxu0 0
        %327 = vmatpush.bf16.xpose.msra.mxu0 0
        %328 = vmatpush.bf16.xpose.msra.mxu0 0
        %329 = vmatpush.bf16.xpose.msra.mxu0 0
        %330 = vmatpush.bf16.xpose.msra.mxu0 0
        %331 = vmatpush.bf16.xpose.msra.mxu0 0
        %332 = vmatpush.bf16.xpose.msra.mxu0 %v323
        %333 = vmatmul.bf16.gmra.mxu0 %v320
        %v334 = vpop.f32.mrf.mxu0
        %v335 = vadd.f32 0.0, %v334
        %v336 = vpop.f32.mrf.mxu0
        %337 = vdwg.mxu0
        %v338 = vsel %vm318, %v335, -inf
        %339 = vmax.xlane.f32.xlu0 %v338
        %v340 = vpop.xlane.xlu0 %339
        %v341 = vsub.f32 %v335, %v340
        %v342 = vmul.f32 %v341, 1.442695
        %v343 = vpow.pop %v342
        %v344 = vsel %vm318, %v343, 0.0
        %345 = vadd.xlane.f32.xlu0 %v344
        %v346 = vpop.xlane.xlu0 %345
        %v347 = vrcp.pop %v346
        %v348 = vmul.f32 %v343, %v347
        %v349 = vpack.c.bf16 %v348, %v348
        %350 = vrot.lane.b32.xlu0 %v314, 64
        %v351 = vpop.permute.xlu0 %350
        %v353 = vsel %vm318, %v349, 0
        %vm355 = vcmask 1043456
        %v357 = vsel %vm355, %v351, 0
        %359 = vmatpush.bf16.msra.mxu0 0
        %360 = vmatpush.bf16.msra.mxu0 0
        %361 = vmatpush.bf16.msra.mxu0 0
        %362 = vmatpush.bf16.msra.mxu0 0
        %363 = vmatpush.bf16.msra.mxu0 0
        %364 = vmatpush.bf16.msra.mxu0 0
        %365 = vmatpush.bf16.msra.mxu0 0
        %366 = vmatpush.bf16.msra.mxu0 %v357
        %367 = vmatmul.bf16.gmra.mxu0 %v353
        %v368 = vpop.f32.mrf.mxu0
        %v369 = vadd.f32 0.0, %v368
        %v370 = vpop.f32.mrf.mxu0
        %371 = vdwg.mxu0
        %v372 = vpack.c.bf16 %v369, %v369
        %v373 = vld [vmem:[#allocation7] sm:$0xf]
        %374 = vrot.lane.b32.xlu0 %v314, 120
        %v375 = vpop.permute.xlu0 %374
        %376 = vrot.lane.b32.xlu0 %v314, 88
        %v377 = vpop.permute.xlu0 %376
        %v379 = vsel %vm318, %v375, 0
        %v382 = vsel %vm318, %v377, 0
        %384 = vmatpush.bf16.xpose.msra.mxu0 0
        %385 = vmatpush.bf16.xpose.msra.mxu0 0
        %386 = vmatpush.bf16.xpose.msra.mxu0 0
        %387 = vmatpush.bf16.xpose.msra.mxu0 0
        %388 = vmatpush.bf16.xpose.msra.mxu0 0
        %389 = vmatpush.bf16.xpose.msra.mxu0 0
        %390 = vmatpush.bf16.xpose.msra.mxu0 0
        %391 = vmatpush.bf16.xpose.msra.mxu0 %v382
        %392 = vmatmul.bf16.gmra.mxu0 %v379
        %v393 = vpop.f32.mrf.mxu0
        %v394 = vadd.f32 0.0, %v393
        %v395 = vpop.f32.mrf.mxu0
        %396 = vdwg.mxu0
        %v397 = vsel %vm318, %v394, -inf
        %398 = vmax.xlane.f32.xlu0 %v397
        %v399 = vpop.xlane.xlu0 %398
        %v400 = vsub.f32 %v394, %v399
        %v401 = vmul.f32 %v400, 1.442695
        %v402 = vpow.pop %v401
        %v403 = vsel %vm318, %v402, 0.0
        %404 = vadd.xlane.f32.xlu0 %v403
        %v405 = vpop.xlane.xlu0 %404
        %v406 = vrcp.pop %v405
        %v407 = vmul.f32 %v402, %v406
        %v408 = vpack.c.bf16 %v407, %v407
        %409 = vrot.lane.b32.xlu0 %v314, 56
        %v410 = vpop.permute.xlu0 %409
        %v412 = vsel %vm318, %v408, 0
        %v415 = vsel %vm355, %v410, 0
        %417 = vmatpush.bf16.msra.mxu0 0
        %418 = vmatpush.bf16.msra.mxu0 0
        %419 = vmatpush.bf16.msra.mxu0 0
        %420 = vmatpush.bf16.msra.mxu0 0
        %421 = vmatpush.bf16.msra.mxu0 0
        %422 = vmatpush.bf16.msra.mxu0 0
        %423 = vmatpush.bf16.msra.mxu0 0
        %424 = vmatpush.bf16.msra.mxu0 %v415
        %425 = vmatmul.bf16.gmra.mxu0 %v412
        %v426 = vpop.f32.mrf.mxu0
        %v427 = vadd.f32 0.0, %v426
        %v428 = vpop.f32.mrf.mxu0
        %429 = vdwg.mxu0
        %v430 = vpack.c.bf16 %v427, %v427
        %v431 = vld [vmem:[#allocation7 + $0x4] sm:$0xf]
        %v433 = vsel %vm318, %v430, 0
        %v436 = vsel %vm355, %v431, 0
        %438 = vmatpush.bf16.msra.mxu0 0
        %439 = vmatpush.bf16.msra.mxu0 0
        %440 = vmatpush.bf16.msra.mxu0 0
        %441 = vmatpush.bf16.msra.mxu0 0
        %442 = vmatpush.bf16.msra.mxu0 0
        %443 = vmatpush.bf16.msra.mxu0 0
        %444 = vmatpush.bf16.msra.mxu0 0
        %445 = vmatpush.bf16.msra.mxu0 %v436
        %446 = vmatmul.bf16.gmra.mxu0 %v433
        %v447 = vpop.f32.mrf.mxu0
        %v448 = vadd.f32 0.0, %v447
        %v449 = vpop.f32.mrf.mxu0
        %450 = vdwg.mxu0
        %v452 = vsel %vm318, %v372, 0
        %v455 = vsel %vm355, %v373, 0
        %457 = vmatpush.bf16.msra.mxu0 0
        %458 = vmatpush.bf16.msra.mxu0 0
        %459 = vmatpush.bf16.msra.mxu0 0
        %460 = vmatpush.bf16.msra.mxu0 0
        %461 = vmatpush.bf16.msra.mxu0 0
        %462 = vmatpush.bf16.msra.mxu0 0
        %463 = vmatpush.bf16.msra.mxu0 0
        %464 = vmatpush.bf16.msra.mxu0 %v455
        %465 = vmatmul.bf16.gmra.mxu0 %v452
        %v466 = vpop.f32.mrf.mxu0
        %v467 = vadd.f32 %v448, %v466
        %v468 = vpop.f32.mrf.mxu0
        %469 = vdwg.mxu0
        %470 = vrot.lane.b32.xlu0 %v314, 112
        %v471 = vpop.permute.xlu0 %470
        %472 = vrot.lane.b32.xlu0 %v314, 80
        %v473 = vpop.permute.xlu0 %472
        %v475 = vsel %vm318, %v471, 0
        %v478 = vsel %vm318, %v473, 0
        %480 = vmatpush.bf16.xpose.msra.mxu0 0
        %481 = vmatpush.bf16.xpose.msra.mxu0 0
        %482 = vmatpush.bf16.xpose.msra.mxu0 0
        %483 = vmatpush.bf16.xpose.msra.mxu0 0
        %484 = vmatpush.bf16.xpose.msra.mxu0 0
        %485 = vmatpush.bf16.xpose.msra.mxu0 0
        %486 = vmatpush.bf16.xpose.msra.mxu0 0
        %487 = vmatpush.bf16.xpose.msra.mxu0 %v478
        %488 = vmatmul.bf16.gmra.mxu0 %v475
        %v489 = vpop.f32.mrf.mxu0
        %v490 = vadd.f32 0.0, %v489
        %v491 = vpop.f32.mrf.mxu0
        %492 = vdwg.mxu0
        %v493 = vsel %vm318, %v490, -inf
        %494 = vmax.xlane.f32.xlu0 %v493
        %v495 = vpop.xlane.xlu0 %494
        %v496 = vsub.f32 %v490, %v495
        %v497 = vmul.f32 %v496, 1.442695
        %v498 = vpow.pop %v497
        %v499 = vsel %vm318, %v498, 0.0
        %500 = vadd.xlane.f32.xlu0 %v499
        %v501 = vpop.xlane.xlu0 %500
        %v502 = vrcp.pop %v501
        %v503 = vmul.f32 %v498, %v502
        %v504 = vpack.c.bf16 %v503, %v503
        %505 = vrot.lane.b32.xlu0 %v314, 48
        %v506 = vpop.permute.xlu0 %505
        %v508 = vsel %vm318, %v504, 0
        %v511 = vsel %vm355, %v506, 0
        %513 = vmatpush.bf16.msra.mxu0 0
        %514 = vmatpush.bf16.msra.mxu0 0
        %515 = vmatpush.bf16.msra.mxu0 0
        %516 = vmatpush.bf16.msra.mxu0 0
        %517 = vmatpush.bf16.msra.mxu0 0
        %518 = vmatpush.bf16.msra.mxu0 0
        %519 = vmatpush.bf16.msra.mxu0 0
        %520 = vmatpush.bf16.msra.mxu0 %v511
        %521 = vmatmul.bf16.gmra.mxu0 %v508
        %v522 = vpop.f32.mrf.mxu0
        %v523 = vadd.f32 0.0, %v522
        %v524 = vpop.f32.mrf.mxu0
        %525 = vdwg.mxu0
        %v526 = vpack.c.bf16 %v523, %v523
        %v527 = vld [vmem:[#allocation7 + $0x8] sm:$0xf]
        %v529 = vsel %vm318, %v526, 0
        %v532 = vsel %vm355, %v527, 0
        %534 = vmatpush.bf16.msra.mxu0 0
        %535 = vmatpush.bf16.msra.mxu0 0
        %536 = vmatpush.bf16.msra.mxu0 0
        %537 = vmatpush.bf16.msra.mxu0 0
        %538 = vmatpush.bf16.msra.mxu0 0
        %539 = vmatpush.bf16.msra.mxu0 0
        %540 = vmatpush.bf16.msra.mxu0 0
        %541 = vmatpush.bf16.msra.mxu0 %v532
        %542 = vmatmul.bf16.gmra.mxu0 %v529
        %v543 = vpop.f32.mrf.mxu0
        %v544 = vadd.f32 0.0, %v543
        %v545 = vpop.f32.mrf.mxu0
        %546 = vdwg.mxu0
        %v547 = vadd.f32 %v467, %v544
        %548 = vrot.lane.b32.xlu0 %v314, 104
        %v549 = vpop.permute.xlu0 %548
        %550 = vrot.lane.b32.xlu0 %v314, 72
        %v551 = vpop.permute.xlu0 %550
        %v553 = vsel %vm318, %v549, 0
        %v556 = vsel %vm318, %v551, 0
        %558 = vmatpush.bf16.xpose.msra.mxu0 0
        %559 = vmatpush.bf16.xpose.msra.mxu0 0
        %560 = vmatpush.bf16.xpose.msra.mxu0 0
        %561 = vmatpush.bf16.xpose.msra.mxu0 0
        %562 = vmatpush.bf16.xpose.msra.mxu0 0
        %563 = vmatpush.bf16.xpose.msra.mxu0 0
        %564 = vmatpush.bf16.xpose.msra.mxu0 0
        %565 = vmatpush.bf16.xpose.msra.mxu0 %v556
        %566 = vmatmul.bf16.gmra.mxu0 %v553
        %v567 = vpop.f32.mrf.mxu0
        %v568 = vadd.f32 0.0, %v567
        %v569 = vpop.f32.mrf.mxu0
        %570 = vdwg.mxu0
        %v571 = vsel %vm318, %v568, -inf
        %572 = vmax.xlane.f32.xlu0 %v571
        %v573 = vpop.xlane.xlu0 %572
        %v574 = vsub.f32 %v568, %v573
        %v575 = vmul.f32 %v574, 1.442695
        %v576 = vpow.pop %v575
        %v577 = vsel %vm318, %v576, 0.0
        %578 = vadd.xlane.f32.xlu0 %v577
        %v579 = vpop.xlane.xlu0 %578
        %v580 = vrcp.pop %v579
        %v581 = vmul.f32 %v576, %v580
        %v582 = vpack.c.bf16 %v581, %v581
        %583 = vrot.lane.b32.xlu0 %v314, 40
        %v584 = vpop.permute.xlu0 %583
        %v586 = vsel %vm318, %v582, 0
        %v589 = vsel %vm355, %v584, 0
        %591 = vmatpush.bf16.msra.mxu0 0
        %592 = vmatpush.bf16.msra.mxu0 0
        %593 = vmatpush.bf16.msra.mxu0 0
        %594 = vmatpush.bf16.msra.mxu0 0
        %595 = vmatpush.bf16.msra.mxu0 0
        %596 = vmatpush.bf16.msra.mxu0 0
        %597 = vmatpush.bf16.msra.mxu0 0
        %598 = vmatpush.bf16.msra.mxu0 %v589
        %599 = vmatmul.bf16.gmra.mxu0 %v586
        %v600 = vpop.f32.mrf.mxu0
        %v601 = vadd.f32 0.0, %v600
        %v602 = vpop.f32.mrf.mxu0
        %603 = vdwg.mxu0
        %v604 = vpack.c.bf16 %v601, %v601
        %v605 = vld [vmem:[#allocation7 + $0xc] sm:$0xf]
        %v607 = vsel %vm318, %v604, 0
        %v610 = vsel %vm355, %v605, 0
        %612 = vmatpush.bf16.msra.mxu0 0
        %613 = vmatpush.bf16.msra.mxu0 0
        %614 = vmatpush.bf16.msra.mxu0 0
        %615 = vmatpush.bf16.msra.mxu0 0
        %616 = vmatpush.bf16.msra.mxu0 0
        %617 = vmatpush.bf16.msra.mxu0 0
        %618 = vmatpush.bf16.msra.mxu0 0
        %619 = vmatpush.bf16.msra.mxu0 %v610
        %620 = vmatmul.bf16.gmra.mxu0 %v607
        %v621 = vpop.f32.mrf.mxu0
        %v622 = vadd.f32 0.0, %v621
        %v623 = vpop.f32.mrf.mxu0
        %624 = vdwg.mxu0
        %v625 = vadd.f32 %v547, %v622
        %v626 = vld [vmem:[%s4] sm:$0x1]
        %v628 = vperm.slane %v626, 0
        %v630 = vadd.f32 %v625, %v628
        %631 = vst.msk [vmem:[%s274] sm:$0xff] %vm297, %v630
        %s632 = sand.u32 %s141, 1
        %s633 = scalar_lea.sflag [#allocation4], %s632
        %s634 = sand.u32 %s141, 1
        %s635 = smul.addr %s634, 8
        %s636 = scalar_lea.vmem [#allocation8], %s635
        // Predicated region
        $region53: #{tpu_custom_call.1} parent=39 // pred_check
          %p637 = pneg %p151
        $region54: #{tpu_custom_call.1} parent=39 // pred_check_branch
          %639 = sbr.rel (%p637) target = $region56
        $region55: #{tpu_custom_call.1} parent=39 // pred_region
          %641 = vsyncadd %s633, 0
          %s642 = smul.addr %s23, 8
          %s643 = scalar_lea.hbm %s5, %s642
          %s645 = sshll.u32 %s636, 4
          %s646 = int_to_ptr.vmem [resolvable:$true] %s645
          %s647 = sshll.u32 %s643, 4
          %s648 = int_to_ptr.hbm [resolvable:$true] %s647
          %650 = dma.vmem_to_hbm [thread:$0]  %s646, 128, %s648, %s633
        $region56: #{tpu_custom_call.1} parent=39 // pred_fallthru
          _
      $region40: #{tpu_custom_call.1} parent=5 // pred_fallthru
        _
      %p651 = scmp.le.s32.totalorder 2, %s18
      // Predicated region
      $region57: #{tpu_custom_call.1} parent=5 // pred_check
        %p652 = pneg %p651
      $region58: #{tpu_custom_call.1} parent=5 // pred_check_branch
        %654 = sbr.rel (%p652) target = $region60
      $region59: #{tpu_custom_call.1} parent=5 // pred_region
        %s655 = ssub.s32 %s18, 2
        // Predicated region
        $region61: #{tpu_custom_call.1} parent=59 // pred_check
          %p656 = pneg %p157
        $region62: #{tpu_custom_call.1} parent=59 // pred_check_branch
          %658 = sbr.rel (%p656) target = $region64
        $region63: #{tpu_custom_call.1} parent=59 // pred_region
          %s659 = sand.u32 %s142, 1
          %s660 = scalar_lea.sflag [#allocation4], %s659
          %s661 = sand.u32 %s142, 1
          %s662 = smul.addr %s661, 8
          %s663 = scalar_lea.vmem [#allocation8], %s662
          %665 = dma.done %s660, 128
        $region64: #{tpu_custom_call.1} parent=59 // pred_fallthru
          _
      $region60: #{tpu_custom_call.1} parent=5 // pred_fallthru
        _
    $region6: #{tpu_custom_call.1} parent=1 // loop_footer
      %s22 = sadd.s32 1, %s18
    $region7: #{tpu_custom_call.1} parent=1 // loop_footer_branch
      %17 = sbr.rel target = $region3
    $region8: #{tpu_custom_call.1} parent=1 // loop_exit
      _
    %666 = vsyncpa [#allocation3], 1
    %s667 = scalar_lea.sflag [#allocation3], 1
    %668 = vsyncpa %s667, 1
    %669 = vsyncpa [#allocation6], 1
    %670 = vsyncpa [#allocation4], 1
    %s671 = scalar_lea.sflag [#allocation4], 1
    %672 = vsyncpa %s671, 1

</llo_original>
